<compile_context>
chip_gen: v7x
topology: tpu7x:2x2x1
jax: 0.10.0
libtpu: 0.0.40
codegen_flags: <defaults>
</compile_context>

<pallas_src>
import math
import jax
import jax.numpy as jnp
from jax.experimental import pallas as pl
from jax.experimental.pallas import tpu as pltpu

HIDDEN_LAYER_1 = 64
HIDDEN_LAYER_2 = 64

DEFAULT_TILE_B = 2048  # 2048-4096 amortizes per-step overhead; still tiny in VMEM


def _round_up(x, m):
    return ((x + m - 1) // m) * m


def _dqn_kernel(x_ref, w1_ref, b1_ref, w2_ref, b2_ref, w3_ref, b3_ref, out_ref):
    # Everything f32; matmuls accumulate in f32 on the MXU.
    x = x_ref[...]
    h1 = jnp.maximum(
        jnp.dot(x, w1_ref[...], preferred_element_type=jnp.float32) + b1_ref[...],
        0.0)
    h2 = jnp.maximum(
        jnp.dot(h1, w2_ref[...], preferred_element_type=jnp.float32) + b2_ref[...],
        0.0)
    # fc3 at a 128-wide (MXU / transpose friendly) padded width.
    q = jnp.dot(h2, w3_ref[...], preferred_element_type=jnp.float32) + b3_ref[...]
    # Tile-aligned (tb, 128) -> (128, tb) transpose on the XLU (idle slots),
    # then keep only the real action rows -> lane-dense (num_actions, tb)
    # store with only useful bytes going to HBM.
    qt = jnp.transpose(q)
    out_ref[...] = qt[: out_ref.shape[0], :]


def _dqn_forward(x, params, *, tile_b=DEFAULT_TILE_B):
    """x: [batch, num_state_space] f32 -> [batch, num_action_space] f32."""
    w1, b1, w2, b2, w3, b3 = params
    batch, num_state = x.shape
    h1 = w1.shape[1]
    h2 = w2.shape[1]
    num_actions = w3.shape[1]

    # fc3 padded width (multiple of 128) — only affects in-kernel vregs/MXU,
    # never the HBM-visible output.
    n_pad = _round_up(max(num_actions, 128), 128)

    # Batch tile: large for throughput, never larger than the (8-aligned)
    # batch. If the grid has >1 step, force the tile to a multiple of 128 so
    # the lane-dense output block stays legal.
    tb = min(tile_b, _round_up(batch, 8))
    if _round_up(batch, 8) > tb:
        tb = _round_up(tb, 128)
    batch_p = _round_up(batch, tb)

    if batch_p != batch:
        x = jnp.pad(x, ((0, batch_p - batch), (0, 0)))

    w3p = jnp.pad(w3, ((0, 0), (0, n_pad - num_actions)))
    b3p = jnp.pad(b3, ((0, 0), (0, n_pad - num_actions)))

    # Constant index_map -> weights/biases stay VMEM-resident across steps.
    const = lambda a: pl.BlockSpec(a.shape, lambda i: (0,) * a.ndim)

    flops = 2 * batch_p * (num_state * h1 + h1 * h2 + h2 * n_pad)
    bytes_accessed = 4 * (batch_p * num_state + batch_p * num_actions
                          + w1.size + b1.size + w2.size + b2.size
                          + w3p.size + b3p.size)

    out_t = pl.pallas_call(
        _dqn_kernel,
        out_shape=jax.ShapeDtypeStruct((num_actions, batch_p), jnp.float32),
        grid=(batch_p // tb,),
        in_specs=[
            pl.BlockSpec((tb, num_state), lambda i: (i, 0)),  # x tiled on batch
            const(w1), const(b1),
            const(w2), const(b2),
            const(w3p), const(b3p),
        ],
        # Transposed output: batch on the lane axis -> unmasked, lane-dense
        # stores and a contiguous, useful-bytes-only HBM write per step.
        out_specs=pl.BlockSpec((num_actions, tb), lambda i: (0, i)),
        compiler_params=pltpu.CompilerParams(
            dimension_semantics=("parallel",),  # megacore split on v7x
        ),
        cost_estimate=pl.CostEstimate(
            flops=flops, transcendentals=0, bytes_accessed=bytes_accessed),
    )(x, w1, b1, w2, b2, w3p, b3p)

    # Cheap (num_actions, batch) -> (batch, num_actions) transpose + unpad.
    return jnp.transpose(out_t)[:batch]


dqn_forward = jax.jit(_dqn_forward, static_argnames=("tile_b",))


def init_params(key, num_state_space, num_action_space):
    """Deterministic init mimicking nn.Linear defaults (U(-1/sqrt(fan_in), +)).

    Weights are stored [in_features, out_features] (transpose of PyTorch) so
    the kernel computes y = x @ W + b; biases are [1, out_features].
    """
    def linear(k, fan_in, fan_out):
        kw, kb = jax.random.split(k)
        bound = 1.0 / math.sqrt(fan_in)
        w = jax.random.uniform(kw, (fan_in, fan_out), jnp.float32, -bound, bound)
        b = jax.random.uniform(kb, (1, fan_out), jnp.float32, -bound, bound)
        return w, b

    k1, k2, k3 = jax.random.split(key, 3)
    w1, b1 = linear(k1, num_state_space, HIDDEN_LAYER_1)
    w2, b2 = linear(k2, HIDDEN_LAYER_1, HIDDEN_LAYER_2)
    w3, b3 = linear(k3, HIDDEN_LAYER_2, num_action_space)
    return (w1, b1, w2, b2, w3, b3)


def _reference_f32(x, params):
    w1, b1, w2, b2, w3, b3 = params
    hp = jax.lax.Precision.HIGHEST
    h = jnp.maximum(jnp.dot(x, w1, precision=hp) + b1, 0.0)
    h = jnp.maximum(jnp.dot(h, w2, precision=hp) + b2, 0.0)
    return jnp.dot(h, w3, precision=hp) + b3


def _check(x, params, **kw):
    out = dqn_forward(x, params, **kw)
    jax.block_until_ready(out)
    ref = _reference_f32(x, params)
    assert out.shape == ref.shape, (out.shape, ref.shape)
    assert jnp.allclose(out, ref, atol=5e-3, rtol=5e-3), float(
        jnp.max(jnp.abs(out - ref)))
    return out


if __name__ == "__main__":
    key = jax.random.PRNGKey(0)
    kx1, kx2, kx3, kp = jax.random.split(key, 4)

    num_state_space = 16
    num_action_space = 4
    params = init_params(kp, num_state_space, num_action_space)

    # small batch (single full-array block)
    x1 = jax.random.normal(kx1, (8, num_state_space), jnp.float32)
    _check(x1, params)

    # non-tile-multiple batch with a small explicit tile: multi-step grid + padding
    x2 = jax.random.normal(kx2, (1030, num_state_space), jnp.float32)
    _check(x2, params, tile_b=256)

    # larger batch with the default tile: 2 grid steps (megacore-friendly), no padding
    x3 = jax.random.normal(kx3, (4096, num_state_space), jnp.float32)
    _check(x3, params)

    print("KERNEL_OK")
</pallas_src>

<mosaic_0001>
module attributes {stable_mosaic.version = 11 : i64} {
  func.func @_dqn_kernel(%arg0: i32, %arg1: memref<8x16xf32, #tpu.memory_space<vmem>>, %arg2: memref<16x64xf32, #tpu.memory_space<vmem>>, %arg3: memref<1x64xf32, #tpu.memory_space<vmem>>, %arg4: memref<64x64xf32, #tpu.memory_space<vmem>>, %arg5: memref<1x64xf32, #tpu.memory_space<vmem>>, %arg6: memref<64x128xf32, #tpu.memory_space<vmem>>, %arg7: memref<1x128xf32, #tpu.memory_space<vmem>>, %arg8: memref<4x8xf32, #tpu.memory_space<vmem>>) attributes {dimension_semantics = [#tpu.dimension_semantics<parallel>], iteration_bounds = array<i64: 1>, scalar_prefetch = 0 : i64, scratch_operands = 0 : i64, tpu.core_type = #tpu.core_type<tc>, window_params = [{transform_indices = @transform_0, window_bounds = array<i64: 8, 16>}, {pipeline_mode = #tpu.pipeline_mode<synchronous>, transform_indices = @transform_1, window_bounds = array<i64: 16, 64>}, {pipeline_mode = #tpu.pipeline_mode<synchronous>, transform_indices = @transform_2, window_bounds = array<i64: 1, 64>}, {pipeline_mode = #tpu.pipeline_mode<synchronous>, transform_indices = @transform_3, window_bounds = array<i64: 64, 64>}, {pipeline_mode = #tpu.pipeline_mode<synchronous>, transform_indices = @transform_4, window_bounds = array<i64: 1, 64>}, {pipeline_mode = #tpu.pipeline_mode<synchronous>, transform_indices = @transform_5, window_bounds = array<i64: 64, 128>}, {pipeline_mode = #tpu.pipeline_mode<synchronous>, transform_indices = @transform_6, window_bounds = array<i64: 1, 128>}, {transform_indices = @transform_7, window_bounds = array<i64: 4, 8>}]} {
    %c0 = arith.constant 0 : index
    %c0_0 = arith.constant 0 : index
    %0 = vector.load %arg1[%c0, %c0_0] : memref<8x16xf32, #tpu.memory_space<vmem>>, vector<8x16xf32>
    %c0_1 = arith.constant 0 : index
    %c0_2 = arith.constant 0 : index
    %1 = vector.load %arg2[%c0_1, %c0_2] : memref<16x64xf32, #tpu.memory_space<vmem>>, vector<16x64xf32>
    %cst = arith.constant dense<0.000000e+00> : vector<8x64xf32>
    %2 = tpu.matmul %0, %1, %cst {dimension_numbers = #tpu.dot_dimension_numbers<[1], [0], [0], [1], [0, 0, 1, 1], [], []>} : vector<8x16xf32>, vector<16x64xf32>, vector<8x64xf32> -> vector<8x64xf32>
    %c0_3 = arith.constant 0 : index
    %c0_4 = arith.constant 0 : index
    %3 = vector.load %arg3[%c0_3, %c0_4] : memref<1x64xf32, #tpu.memory_space<vmem>>, vector<1x64xf32>
    %4 = vector.broadcast %3 : vector<1x64xf32> to vector<8x64xf32>
    %5 = arith.addf %2, %4 : vector<8x64xf32>
    %cst_5 = arith.constant 0.000000e+00 : f32
    %6 = vector.broadcast %cst_5 : f32 to vector<8x64xf32>
    %7 = arith.maximumf %5, %6 : vector<8x64xf32>
    %c0_6 = arith.constant 0 : index
    %c0_7 = arith.constant 0 : index
    %8 = vector.load %arg4[%c0_6, %c0_7] : memref<64x64xf32, #tpu.memory_space<vmem>>, vector<64x64xf32>
    %cst_8 = arith.constant dense<0.000000e+00> : vector<8x64xf32>
    %9 = tpu.matmul %7, %8, %cst_8 {dimension_numbers = #tpu.dot_dimension_numbers<[1], [0], [0], [1], [0, 0, 1, 1], [], []>} : vector<8x64xf32>, vector<64x64xf32>, vector<8x64xf32> -> vector<8x64xf32>
    %c0_9 = arith.constant 0 : index
    %c0_10 = arith.constant 0 : index
    %10 = vector.load %arg5[%c0_9, %c0_10] : memref<1x64xf32, #tpu.memory_space<vmem>>, vector<1x64xf32>
    %11 = vector.broadcast %10 : vector<1x64xf32> to vector<8x64xf32>
    %12 = arith.addf %9, %11 : vector<8x64xf32>
    %cst_11 = arith.constant 0.000000e+00 : f32
    %13 = vector.broadcast %cst_11 : f32 to vector<8x64xf32>
    %14 = arith.maximumf %12, %13 : vector<8x64xf32>
    %c0_12 = arith.constant 0 : index
    %c0_13 = arith.constant 0 : index
    %15 = vector.load %arg6[%c0_12, %c0_13] : memref<64x128xf32, #tpu.memory_space<vmem>>, vector<64x128xf32>
    %cst_14 = arith.constant dense<0.000000e+00> : vector<8x128xf32>
    %16 = tpu.matmul %14, %15, %cst_14 {dimension_numbers = #tpu.dot_dimension_numbers<[1], [0], [0], [1], [0, 0, 1, 1], [], []>} : vector<8x64xf32>, vector<64x128xf32>, vector<8x128xf32> -> vector<8x128xf32>
    %c0_15 = arith.constant 0 : index
    %c0_16 = arith.constant 0 : index
    %17 = vector.load %arg7[%c0_15, %c0_16] : memref<1x128xf32, #tpu.memory_space<vmem>>, vector<1x128xf32>
    %18 = vector.broadcast %17 : vector<1x128xf32> to vector<8x128xf32>
    %19 = arith.addf %16, %18 : vector<8x128xf32>
    %20 = tpu.transpose %19, [1, 0] : vector<8x128xf32> -> vector<128x8xf32>
    %21 = vector.extract_strided_slice %20 {offsets = [0, 0], sizes = [4, 8], strides = [1, 1]} : vector<128x8xf32> to vector<4x8xf32>
    %c0_17 = arith.constant 0 : index
    %c0_18 = arith.constant 0 : index
    %22 = vector.load %arg8[%c0_17, %c0_18] : memref<4x8xf32, #tpu.memory_space<vmem>>, vector<4x8xf32>
    tpu.vector_store %arg8[%c0_17, %c0_18], %21 {strides = array<i32>} : memref<4x8xf32, #tpu.memory_space<vmem>>, vector<4x8xf32>,
    return
  }
  func.func @transform_0(%arg0: i32) -> (i32, i32) {
    %c0_i32 = arith.constant 0 : i32
    %c0_i32_0 = arith.constant 0 : i32
    return %arg0, %c0_i32 : i32, i32
  }
  func.func @transform_1(%arg0: i32) -> (i32, i32) {
    %c0_i32 = arith.constant 0 : i32
    %c0_i32_0 = arith.constant 0 : i32
    %c0_i32_1 = arith.constant 0 : i32
    return %c0_i32, %c0_i32_0 : i32, i32
  }
  func.func @transform_2(%arg0: i32) -> (i32, i32) {
    %c0_i32 = arith.constant 0 : i32
    %c0_i32_0 = arith.constant 0 : i32
    %c0_i32_1 = arith.constant 0 : i32
    return %c0_i32, %c0_i32_0 : i32, i32
  }
  func.func @transform_3(%arg0: i32) -> (i32, i32) {
    %c0_i32 = arith.constant 0 : i32
    %c0_i32_0 = arith.constant 0 : i32
    %c0_i32_1 = arith.constant 0 : i32
    return %c0_i32, %c0_i32_0 : i32, i32
  }
  func.func @transform_4(%arg0: i32) -> (i32, i32) {
    %c0_i32 = arith.constant 0 : i32
    %c0_i32_0 = arith.constant 0 : i32
    %c0_i32_1 = arith.constant 0 : i32
    return %c0_i32, %c0_i32_0 : i32, i32
  }
  func.func @transform_5(%arg0: i32) -> (i32, i32) {
    %c0_i32 = arith.constant 0 : i32
    %c0_i32_0 = arith.constant 0 : i32
    %c0_i32_1 = arith.constant 0 : i32
    return %c0_i32, %c0_i32_0 : i32, i32
  }
  func.func @transform_6(%arg0: i32) -> (i32, i32) {
    %c0_i32 = arith.constant 0 : i32
    %c0_i32_0 = arith.constant 0 : i32
    %c0_i32_1 = arith.constant 0 : i32
    return %c0_i32, %c0_i32_0 : i32, i32
  }
  func.func @transform_7(%arg0: i32) -> (i32, i32) {
    %c0_i32 = arith.constant 0 : i32
    %c0_i32_0 = arith.constant 0 : i32
    return %c0_i32, %arg0 : i32, i32
  }
}

</mosaic_0001>

<llo_original>
// kernel: _dqn_forward.1
$region0: #{_dqn_forward.1}
  #allocation0 [shape = 'u32[]', space=smem, size = 0x4, offset = 0x4, fixed_abs, tag = 'smem constant byte address 0x4 - core index']
  #allocation1 [shape = 'u32[144,128]{1,0:T(1,128)}', space=vmem, size = 0x12000, scoped, tag = 'internal scratch']
  %s0 = inlined_call_operand.vmem [shape: f32[8,16], index: 0, kind: input, shape index: {}]
  %s1 = inlined_call_operand.vmem [shape: f32[16,64], index: 1, kind: input, shape index: {}]
  %s2 = inlined_call_operand.vmem [shape: f32[1,64], index: 2, kind: input, shape index: {}]
  %s3 = inlined_call_operand.vmem [shape: f32[64,64], index: 3, kind: input, shape index: {}]
  %s4 = inlined_call_operand.vmem [shape: f32[1,64], index: 4, kind: input, shape index: {}]
  %s5 = inlined_call_operand.vmem [shape: f32[64,128], index: 5, kind: input, shape index: {}]
  %s6 = inlined_call_operand.vmem [shape: f32[1,128], index: 6, kind: input, shape index: {}]
  %s7 = inlined_call_operand.hbm [shape: f32[4,8], index: 7, kind: output, shape index: {}]
  %s8 = sld [smem:[#allocation0]]
  $region38: #{_dqn_forward.1} parent=0
    _
  %s10 = ssub.s32 1, %s8
  %s11 = scalar_select 0, %s10, %s8
  $region1: #{_dqn_forward.1} parent=0
    #allocation2 [shape = 'u8[2048]{0}', space=vmem, size = 0x800, scoped, tag = 'output window, operand 0, single buffered']
    #allocation3 [shape = 's32[1]{0}', space=sflag, size = 0x4, scoped, tag = 'scoped memory for _dqn_forward.1']
    %12 = vsyncpa [#allocation3], 0
    // Predicated region
    $region2: #{_dqn_forward.1} parent=1 // pred_check
      _
    $region3: #{_dqn_forward.1} parent=1 // pred_check_branch
      %14 = sbr.rel (0) target = $region5
    $region4: #{_dqn_forward.1} parent=1 // pred_region
      _
    $region5: #{_dqn_forward.1} parent=1 // pred_fallthru
      _
    // Predicated region
    $region6: #{_dqn_forward.1} parent=1 // pred_check
      _
    $region7: #{_dqn_forward.1} parent=1 // pred_check_branch
      %16 = sbr.rel (0) target = $region9
    $region8: #{_dqn_forward.1} parent=1 // pred_region
      _
    $region9: #{_dqn_forward.1} parent=1 // pred_fallthru
      _
    // Predicated region
    $region10: #{_dqn_forward.1} parent=1 // pred_check
      _
    $region11: #{_dqn_forward.1} parent=1 // pred_check_branch
      %18 = sbr.rel (0) target = $region13
    $region12: #{_dqn_forward.1} parent=1 // pred_region
      _
    $region13: #{_dqn_forward.1} parent=1 // pred_fallthru
      _
    // Predicated region
    $region14: #{_dqn_forward.1} parent=1 // pred_check
      _
    $region15: #{_dqn_forward.1} parent=1 // pred_check_branch
      %20 = sbr.rel (0) target = $region17
    $region16: #{_dqn_forward.1} parent=1 // pred_region
      _
    $region17: #{_dqn_forward.1} parent=1 // pred_fallthru
      _
    // Predicated region
    $region18: #{_dqn_forward.1} parent=1 // pred_check
      _
    $region19: #{_dqn_forward.1} parent=1 // pred_check_branch
      %22 = sbr.rel (0) target = $region21
    $region20: #{_dqn_forward.1} parent=1 // pred_region
      _
    $region21: #{_dqn_forward.1} parent=1 // pred_fallthru
      _
    // Predicated region
    $region22: #{_dqn_forward.1} parent=1 // pred_check
      _
    $region23: #{_dqn_forward.1} parent=1 // pred_check_branch
      %24 = sbr.rel (0) target = $region25
    $region24: #{_dqn_forward.1} parent=1 // pred_region
      _
    $region25: #{_dqn_forward.1} parent=1 // pred_fallthru
      _
    // Predicated region
    $region26: #{_dqn_forward.1} parent=1 // pred_check
      _
    $region27: #{_dqn_forward.1} parent=1 // pred_check_branch
      %26 = sbr.rel (0) target = $region29
    $region28: #{_dqn_forward.1} parent=1 // pred_region
      _
    $region29: #{_dqn_forward.1} parent=1 // pred_fallthru
      _
    %v27 = vld [vmem:[%s0] sm:$0xff]
    %v28 = vld [vmem:[%s1] sm:$0xff]
    %v29 = vld [vmem:[%s1 + $0x8] sm:$0xff]
    %v30 = vld [vmem:[%s2] sm:$0x1]
    %v32 = vlaneseq
    %v33 = vshrl.u32 %v32, 7
    %v34 = vsub.s32 0, %v33
    %v35 = vrot.slane %v30, %v34
    %vm37 = vcmask 130048
    %v39 = vsel %vm37, %v27, 0
    %41 = vmatprep.subr.mxu0 0.0
    %42 = vmatpush1.msra.mxu0 %v28
    %43 = vmatprep.subr.mxu0 0.0
    %44 = vmatpush1.msra.mxu0 %v29
    %45 = vmatprep.subr.mxu0 0.0
    %46 = vmatpush1.msra.mxu0 0.0
    %47 = vmatprep.subr.mxu0 0.0
    %48 = vmatpush1.msra.mxu0 0.0
    %49 = vmatprep.subr.mxu0 0.0
    %50 = vmatpush1.msra.mxu0 0.0
    %51 = vmatprep.subr.mxu0 0.0
    %52 = vmatpush1.msra.mxu0 0.0
    %53 = vmatprep.subr.mxu0 0.0
    %54 = vmatpush1.msra.mxu0 0.0
    %55 = vmatprep.subr.mxu0 0.0
    %56 = vmatpush1.msra.mxu0 0.0
    %57 = vmatprep.subr.mxu0 0.0
    %58 = vmatpush1.msra.mxu0 0.0
    %59 = vmatprep.subr.mxu0 0.0
    %60 = vmatpush1.msra.mxu0 0.0
    %61 = vmatprep.subr.mxu0 0.0
    %62 = vmatpush1.msra.mxu0 0.0
    %63 = vmatprep.subr.mxu0 0.0
    %64 = vmatpush1.msra.mxu0 0.0
    %65 = vmatprep.subr.mxu0 0.0
    %66 = vmatpush1.msra.mxu0 0.0
    %67 = vmatprep.subr.mxu0 0.0
    %68 = vmatpush1.msra.mxu0 0.0
    %69 = vmatprep.subr.mxu0 0.0
    %70 = vmatpush1.msra.mxu0 0.0
    %71 = vmatprep.subr.mxu0 0.0
    %72 = vmatpush1.msra.mxu0 0.0
    %73 = vmatprep.subr.mxu0 0.0
    %74 = vmatpush1.msra.mxu0 0.0
    %75 = vmatprep.subr.mxu0 0.0
    %76 = vmatpush1.msra.mxu0 0.0
    %77 = vmatprep.subr.mxu0 0.0
    %78 = vmatpush1.msra.mxu0 0.0
    %79 = vmatprep.subr.mxu0 0.0
    %80 = vmatpush1.msra.mxu0 0.0
    %81 = vmatprep.subr.mxu0 0.0
    %82 = vmatpush1.msra.mxu0 0.0
    %83 = vmatprep.subr.mxu0 0.0
    %84 = vmatpush1.msra.mxu0 0.0
    %85 = vmatprep.subr.mxu0 0.0
    %86 = vmatpush1.msra.mxu0 0.0
    %87 = vmatprep.subr.mxu0 0.0
    %88 = vmatpush1.msra.mxu0 0.0
    %89 = vmatprep.subr.mxu0 0.0
    %90 = vmatpush1.msra.mxu0 0.0
    %91 = vmatprep.subr.mxu0 0.0
    %92 = vmatpush1.msra.mxu0 0.0
    %93 = vmatprep.subr.mxu0 0.0
    %94 = vmatpush1.msra.mxu0 0.0
    %95 = vmatprep.subr.mxu0 0.0
    %96 = vmatpush1.msra.mxu0 0.0
    %97 = vmatprep.subr.mxu0 0.0
    %98 = vmatpush1.msra.mxu0 0.0
    %99 = vmatprep.subr.mxu0 0.0
    %100 = vmatpush1.msra.mxu0 0.0
    %101 = vmatprep.subr.mxu0 0.0
    %102 = vmatpush1.msra.mxu0 0.0
    %103 = vmatprep.subr.mxu0 0.0
    %104 = vmatpush1.msra.mxu0 0.0
    %105 = vmatprep.mubr.f32.mxu0 0.0
    %106 = vmatmul.mubr.f32.gmra.mrb[0].mxu0 %v39
    %v107 = vpop.f32.mrb[0].mxu0
    %v108 = vadd.f32 %v35, %v107
    %v109 = vpop.f32.mrb[0].mxu0
    %110 = vdwg.mxu0
    %v111 = vmax.f32 %v108, 0.0
    %v112 = vld [vmem:[%s3] sm:$0xff]
    %v113 = vld [vmem:[%s3 + $0x8] sm:$0xff]
    %v114 = vld [vmem:[%s3 + $0x10] sm:$0xff]
    %v115 = vld [vmem:[%s3 + $0x18] sm:$0xff]
    %v116 = vld [vmem:[%s3 + $0x20] sm:$0xff]
    %v117 = vld [vmem:[%s3 + $0x28] sm:$0xff]
    %v118 = vld [vmem:[%s3 + $0x30] sm:$0xff]
    %v119 = vld [vmem:[%s3 + $0x38] sm:$0xff]
    %v120 = vld [vmem:[%s4] sm:$0x1]
    %v122 = vlaneseq
    %v123 = vshrl.u32 %v122, 7
    %v124 = vsub.s32 0, %v123
    %v125 = vrot.slane %v120, %v124
    %vm127 = vcmask 523264
    %v129 = vsel %vm127, %v111, 0
    %131 = vmatprep.subr.mxu0 0.0
    %132 = vmatpush1.msra.mxu0 %v112
    %133 = vmatprep.subr.mxu0 0.0
    %134 = vmatpush1.msra.mxu0 %v113
    %135 = vmatprep.subr.mxu0 0.0
    %136 = vmatpush1.msra.mxu0 %v114
    %137 = vmatprep.subr.mxu0 0.0
    %138 = vmatpush1.msra.mxu0 %v115
    %139 = vmatprep.subr.mxu0 0.0
    %140 = vmatpush1.msra.mxu0 %v116
    %141 = vmatprep.subr.mxu0 0.0
    %142 = vmatpush1.msra.mxu0 %v117
    %143 = vmatprep.subr.mxu0 0.0
    %144 = vmatpush1.msra.mxu0 %v118
    %145 = vmatprep.subr.mxu0 0.0
    %146 = vmatpush1.msra.mxu0 %v119
    %147 = vmatprep.subr.mxu0 0.0
    %148 = vmatpush1.msra.mxu0 0.0
    %149 = vmatprep.subr.mxu0 0.0
    %150 = vmatpush1.msra.mxu0 0.0
    %151 = vmatprep.subr.mxu0 0.0
    %152 = vmatpush1.msra.mxu0 0.0
    %153 = vmatprep.subr.mxu0 0.0
    %154 = vmatpush1.msra.mxu0 0.0
    %155 = vmatprep.subr.mxu0 0.0
    %156 = vmatpush1.msra.mxu0 0.0
    %157 = vmatprep.subr.mxu0 0.0
    %158 = vmatpush1.msra.mxu0 0.0
    %159 = vmatprep.subr.mxu0 0.0
    %160 = vmatpush1.msra.mxu0 0.0
    %161 = vmatprep.subr.mxu0 0.0
    %162 = vmatpush1.msra.mxu0 0.0
    %163 = vmatprep.subr.mxu0 0.0
    %164 = vmatpush1.msra.mxu0 0.0
    %165 = vmatprep.subr.mxu0 0.0
    %166 = vmatpush1.msra.mxu0 0.0
    %167 = vmatprep.subr.mxu0 0.0
    %168 = vmatpush1.msra.mxu0 0.0
    %169 = vmatprep.subr.mxu0 0.0
    %170 = vmatpush1.msra.mxu0 0.0
    %171 = vmatprep.subr.mxu0 0.0
    %172 = vmatpush1.msra.mxu0 0.0
    %173 = vmatprep.subr.mxu0 0.0
    %174 = vmatpush1.msra.mxu0 0.0
    %175 = vmatprep.subr.mxu0 0.0
    %176 = vmatpush1.msra.mxu0 0.0
    %177 = vmatprep.subr.mxu0 0.0
    %178 = vmatpush1.msra.mxu0 0.0
    %179 = vmatprep.subr.mxu0 0.0
    %180 = vmatpush1.msra.mxu0 0.0
    %181 = vmatprep.subr.mxu0 0.0
    %182 = vmatpush1.msra.mxu0 0.0
    %183 = vmatprep.subr.mxu0 0.0
    %184 = vmatpush1.msra.mxu0 0.0
    %185 = vmatprep.subr.mxu0 0.0
    %186 = vmatpush1.msra.mxu0 0.0
    %187 = vmatprep.subr.mxu0 0.0
    %188 = vmatpush1.msra.mxu0 0.0
    %189 = vmatprep.subr.mxu0 0.0
    %190 = vmatpush1.msra.mxu0 0.0
    %191 = vmatprep.subr.mxu0 0.0
    %192 = vmatpush1.msra.mxu0 0.0
    %193 = vmatprep.subr.mxu0 0.0
    %194 = vmatpush1.msra.mxu0 0.0
    %195 = vmatprep.mubr.f32.mxu0 0.0
    %196 = vmatmul.mubr.f32.gmra.mrb[0].mxu0 %v129
    %v197 = vpop.f32.mrb[0].mxu0
    %v198 = vadd.f32 %v125, %v197
    %v199 = vpop.f32.mrb[0].mxu0
    %200 = vdwg.mxu0
    %v201 = vmax.f32 %v198, 0.0
    %v202 = vld [vmem:[%s5] sm:$0xff]
    %v203 = vld [vmem:[%s5 + $0x8] sm:$0xff]
    %v204 = vld [vmem:[%s5 + $0x10] sm:$0xff]
    %v205 = vld [vmem:[%s5 + $0x18] sm:$0xff]
    %v206 = vld [vmem:[%s5 + $0x20] sm:$0xff]
    %v207 = vld [vmem:[%s5 + $0x28] sm:$0xff]
    %v208 = vld [vmem:[%s5 + $0x30] sm:$0xff]
    %v209 = vld [vmem:[%s5 + $0x38] sm:$0xff]
    %v210 = vld [vmem:[%s6] sm:$0x1]
    %v212 = vlaneseq
    %v213 = vshrl.u32 %v212, 7
    %v214 = vsub.s32 0, %v213
    %v215 = vrot.slane %v210, %v214
    %v218 = vsel %vm127, %v201, 0
    %220 = vmatprep.subr.mxu0 0.0
    %221 = vmatpush1.msra.mxu0 %v202
    %222 = vmatprep.subr.mxu0 0.0
    %223 = vmatpush1.msra.mxu0 %v203
    %224 = vmatprep.subr.mxu0 0.0
    %225 = vmatpush1.msra.mxu0 %v204
    %226 = vmatprep.subr.mxu0 0.0
    %227 = vmatpush1.msra.mxu0 %v205
    %228 = vmatprep.subr.mxu0 0.0
    %229 = vmatpush1.msra.mxu0 %v206
    %230 = vmatprep.subr.mxu0 0.0
    %231 = vmatpush1.msra.mxu0 %v207
    %232 = vmatprep.subr.mxu0 0.0
    %233 = vmatpush1.msra.mxu0 %v208
    %234 = vmatprep.subr.mxu0 0.0
    %235 = vmatpush1.msra.mxu0 %v209
    %236 = vmatprep.subr.mxu0 0.0
    %237 = vmatpush1.msra.mxu0 0.0
    %238 = vmatprep.subr.mxu0 0.0
    %239 = vmatpush1.msra.mxu0 0.0
    %240 = vmatprep.subr.mxu0 0.0
    %241 = vmatpush1.msra.mxu0 0.0
    %242 = vmatprep.subr.mxu0 0.0
    %243 = vmatpush1.msra.mxu0 0.0
    %244 = vmatprep.subr.mxu0 0.0
    %245 = vmatpush1.msra.mxu0 0.0
    %246 = vmatprep.subr.mxu0 0.0
    %247 = vmatpush1.msra.mxu0 0.0
    %248 = vmatprep.subr.mxu0 0.0
    %249 = vmatpush1.msra.mxu0 0.0
    %250 = vmatprep.subr.mxu0 0.0
    %251 = vmatpush1.msra.mxu0 0.0
    %252 = vmatprep.subr.mxu0 0.0
    %253 = vmatpush1.msra.mxu0 0.0
    %254 = vmatprep.subr.mxu0 0.0
    %255 = vmatpush1.msra.mxu0 0.0
    %256 = vmatprep.subr.mxu0 0.0
    %257 = vmatpush1.msra.mxu0 0.0
    %258 = vmatprep.subr.mxu0 0.0
    %259 = vmatpush1.msra.mxu0 0.0
    %260 = vmatprep.subr.mxu0 0.0
    %261 = vmatpush1.msra.mxu0 0.0
    %262 = vmatprep.subr.mxu0 0.0
    %263 = vmatpush1.msra.mxu0 0.0
    %264 = vmatprep.subr.mxu0 0.0
    %265 = vmatpush1.msra.mxu0 0.0
    %266 = vmatprep.subr.mxu0 0.0
    %267 = vmatpush1.msra.mxu0 0.0
    %268 = vmatprep.subr.mxu0 0.0
    %269 = vmatpush1.msra.mxu0 0.0
    %270 = vmatprep.subr.mxu0 0.0
    %271 = vmatpush1.msra.mxu0 0.0
    %272 = vmatprep.subr.mxu0 0.0
    %273 = vmatpush1.msra.mxu0 0.0
    %274 = vmatprep.subr.mxu0 0.0
    %275 = vmatpush1.msra.mxu0 0.0
    %276 = vmatprep.subr.mxu0 0.0
    %277 = vmatpush1.msra.mxu0 0.0
    %278 = vmatprep.subr.mxu0 0.0
    %279 = vmatpush1.msra.mxu0 0.0
    %280 = vmatprep.subr.mxu0 0.0
    %281 = vmatpush1.msra.mxu0 0.0
    %282 = vmatprep.subr.mxu0 0.0
    %283 = vmatpush1.msra.mxu0 0.0
    %284 = vmatprep.mubr.f32.mxu0 0.0
    %285 = vmatmul.mubr.f32.gmra.mrb[0].mxu0 %v218
    %v286 = vpop.f32.mrb[0].mxu0
    %v287 = vadd.f32 %v215, %v286
    %v288 = vpop.f32.mrb[0].mxu0
    %289 = vdwg.mxu0
    %290 = vxpose.xlu0.b32.start [1/16] %v287, 128
    %291 = vxpose.xlu0.b32.cont [2/16] 0.0, 128
    %292 = vxpose.xlu0.b32.cont [3/16] 0.0, 128
    %293 = vxpose.xlu0.b32.cont [4/16] 0.0, 128
    %294 = vxpose.xlu0.b32.cont [5/16] 0.0, 128
    %295 = vxpose.xlu0.b32.cont [6/16] 0.0, 128
    %296 = vxpose.xlu0.b32.cont [7/16] 0.0, 128
    %297 = vxpose.xlu0.b32.cont [8/16] 0.0, 128
    %298 = vxpose.xlu0.b32.cont [9/16] 0.0, 128
    %299 = vxpose.xlu0.b32.cont [10/16] 0.0, 128
    %300 = vxpose.xlu0.b32.cont [11/16] 0.0, 128
    %301 = vxpose.xlu0.b32.cont [12/16] 0.0, 128
    %302 = vxpose.xlu0.b32.cont [13/16] 0.0, 128
    %303 = vxpose.xlu0.b32.cont [14/16] 0.0, 128
    %304 = vxpose.xlu0.b32.cont [15/16] 0.0, 128
    %305 = vxpose.xlu0.b32.end [16/16] 0.0, 128
    %v306 = vpop.trf.xlu0
    %v307 = vpop.trf.xlu0
    %v308 = vpop.trf.xlu0
    %v309 = vpop.trf.xlu0
    %v310 = vpop.trf.xlu0
    %v311 = vpop.trf.xlu0
    %v312 = vpop.trf.xlu0
    %v313 = vpop.trf.xlu0
    %v314 = vpop.trf.xlu0
    %v315 = vpop.trf.xlu0
    %v316 = vpop.trf.xlu0
    %v317 = vpop.trf.xlu0
    %v318 = vpop.trf.xlu0
    %v319 = vpop.trf.xlu0
    %v320 = vpop.trf.xlu0
    %v321 = vpop.trf.xlu0
    %vm322 = vcmask 60416
    %323 = vst.msk [vmem:[#allocation2] sm:$0xf] %vm322, %v306
    // Predicated region
    $region30: #{_dqn_forward.1} parent=1 // pred_check
      _
    $region31: #{_dqn_forward.1} parent=1 // pred_check_branch
      %325 = sbr.rel (0) target = $region33
    $region32: #{_dqn_forward.1} parent=1 // pred_region
      %s327 = ssub.s32 64, 64
      %328 = vsyncadd [#allocation3], %s327
      %s330 = sshll.u32 [#allocation2], 4
      %s331 = int_to_ptr.vmem [resolvable:$true] %s330
      %333 = dma.vmem_to_hbm [thread:$0]  %s331, 64, %s7, [#allocation3]
    $region33: #{_dqn_forward.1} parent=1 // pred_fallthru
      _
    // Predicated region
    $region34: #{_dqn_forward.1} parent=1 // pred_check
      _
    $region35: #{_dqn_forward.1} parent=1 // pred_check_branch
      %335 = sbr.rel (0) target = $region37
    $region36: #{_dqn_forward.1} parent=1 // pred_region
      %336 = dma.done [#allocation3], 64
    $region37: #{_dqn_forward.1} parent=1 // pred_fallthru
      _
    %337 = vsyncpa [#allocation3], 1

</llo_original>
